<compile_context>
chip_gen: v6e
topology: v6e:2x2x1
jax: 0.10.0
libtpu: 0.0.40
codegen_flags: <defaults>
</compile_context>

<pallas_src>
import jax
import jax.numpy as jnp
from jax.experimental import pallas as pl
from jax.experimental.pallas import tpu as pltpu


def _round_up(v, m):
    return ((v + m - 1) // m) * m


def attribute_network_kernel(x_ref, w1_ref, b1_ref, w2_ref, b2_ref, o_ref):
    # fc1 + ReLU  (MXU matmul, f32 accumulate; bias-add + ReLU in f32 on the VPU)
    h = jnp.dot(x_ref[...], w1_ref[...], preferred_element_type=jnp.float32)
    h = jnp.maximum(h + b1_ref[...].astype(jnp.float32), 0.0)

    # Cast once, deliberately, only if fc2's weights are lower precision.
    if w2_ref.dtype != jnp.float32:
        h = h.astype(w2_ref.dtype)

    # fc2 + ReLU.  The wrapper zero-padded fc2's output dim to a multiple of
    # 128 lanes, so this is a dense, unmasked 128-lane store (no relayout).
    o = jnp.dot(h, w2_ref[...], preferred_element_type=jnp.float32)
    o = jnp.maximum(o + b2_ref[...].astype(jnp.float32), 0.0)
    o_ref[...] = o.astype(o_ref.dtype)


def _default_vmem_limit_bytes():
    """Generation-aware scoped-VMEM request.

    v5e/v6e have 128 MiB physical VMEM, v7x has 64 MiB; cap the request at
    32 MiB (safe on every generation, above v5e's 16 MiB default scope which we
    raise explicitly via CompilerParams)."""
    try:
        cap = pltpu.get_tpu_info().vmem_capacity_bytes
        return int(min(cap // 2, 32 * 1024 * 1024))
    except Exception:
        return 16 * 1024 * 1024  # conservative fallback (v5e default scope)


def _choose_block_n(N, in_dim, hid, out_pad, x_itemsize, out_itemsize,
                    w_bytes, tile_budget_bytes, max_block_n):
    """Pick the batch tile: as large as fits VMEM, capped at max_block_n."""
    # Lane-padded per-row VMEM footprint (VMEM tiles are padded to (8,128)):
    #   x tile   : double-buffered, in_dim padded to 128 lanes
    #   out tile : double-buffered, out_pad lanes
    #   h (f32)  : hid padded to 128 lanes
    #   o (f32)  : pre-cast accumulator, out_pad lanes
    in_p = _round_up(in_dim, 128)
    hid_p = _round_up(hid, 128)
    per_row = (2 * in_p * x_itemsize
               + 2 * out_pad * out_itemsize
               + hid_p * 4
               + out_pad * 4)
    budget = max(tile_budget_bytes - w_bytes, 8 * per_row)
    max_rows = budget // per_row

    block_n = min(int(max_rows), max_block_n, N)
    if N > max_block_n:
        # Large batch: keep >= 2 grid steps so dimension_semantics=("parallel",)
        # can shard across v7x's two TensorCores and DMA overlaps compute.
        block_n = min(block_n, _round_up(pl.cdiv(N, 2), 8))
    block_n = max((block_n // 8) * 8, 8)  # sublane-align
    return block_n


def attribute_network(x, w1, b1, w2, b2, *, block_n=None, max_block_n=1024,
                      vmem_limit_bytes=None):
    """x: (N, in); w1: (in, hid); b1: (1, hid); w2: (hid, out); b2: (1, out).

    bf16 inputs/weights are accepted; matmuls accumulate in f32 and the
    bias-add / ReLU stay in f32 (mixed-precision divergence from a pure-f32
    PyTorch reference is intentional when low-precision weights are passed).
    """
    N, in_dim = x.shape
    hid = w1.shape[1]
    out_dim = w2.shape[1]

    # --- Lane-dense output: zero-pad fc2's output dim to a multiple of 128 ---
    # Padded columns compute ReLU(x@0 + 0) = 0 and are sliced off below.
    out_pad = _round_up(out_dim, 128)
    if out_pad != out_dim:
        w2p = jnp.pad(w2, ((0, 0), (0, out_pad - out_dim)))
        b2p = jnp.pad(b2, ((0, 0), (0, out_pad - out_dim)))
    else:
        w2p, b2p = w2, b2

    x_itemsize = jnp.dtype(x.dtype).itemsize
    w_itemsize = jnp.dtype(w1.dtype).itemsize

    # Weight/bias VMEM footprint, lane/sublane padded, counted double-buffered
    # to stay conservative (they are grid-invariant so Pallas only DMAs once).
    w_bytes = 2 * w_itemsize * (
        _round_up(in_dim, 8) * _round_up(hid, 128)
        + 8 * _round_up(hid, 128)
        + _round_up(hid, 8) * out_pad
        + 8 * out_pad)

    if vmem_limit_bytes is None:
        vmem_limit_bytes = _default_vmem_limit_bytes()
    tile_budget = int(0.8 * vmem_limit_bytes)  # headroom for compiler scratch

    if block_n is None:
        block_n = _choose_block_n(N, in_dim, hid, out_pad, x_itemsize,
                                  x_itemsize, w_bytes, tile_budget, max_block_n)

    # Ragged batch: cdiv grid + zero-pad N up to a multiple of block_n
    # (replaces the old divisibility assert; padded rows are sliced off).
    grid_n = pl.cdiv(N, block_n)
    n_pad = grid_n * block_n
    x_in = jnp.pad(x, ((0, n_pad - N), (0, 0))) if n_pad != N else x

    flops = 2 * N * (in_dim * hid + hid * out_dim)
    bytes_accessed = (x.size * x_itemsize
                      + (w1.size + b1.size + w2.size + b2.size) * w_itemsize
                      + N * out_dim * x_itemsize)
    cost = pl.CostEstimate(flops=flops, transcendentals=0,
                           bytes_accessed=bytes_accessed)

    out = pl.pallas_call(
        attribute_network_kernel,
        out_shape=jax.ShapeDtypeStruct((n_pad, out_pad), x.dtype),
        grid_spec=pltpu.PrefetchScalarGridSpec(
            num_scalar_prefetch=0,
            grid=(grid_n,),
            in_specs=[
                pl.BlockSpec((block_n, in_dim), lambda i: (i, 0)),  # x tile
                pl.BlockSpec((in_dim, hid), lambda i: (0, 0)),      # W1 (resident)
                pl.BlockSpec((1, hid), lambda i: (0, 0)),           # b1
                pl.BlockSpec((hid, out_pad), lambda i: (0, 0)),     # W2 (resident, padded)
                pl.BlockSpec((1, out_pad), lambda i: (0, 0)),       # b2
            ],
            out_specs=pl.BlockSpec((block_n, out_pad), lambda i: (i, 0)),
        ),
        compiler_params=pltpu.CompilerParams(
            dimension_semantics=("parallel",),
            vmem_limit_bytes=vmem_limit_bytes),
        cost_estimate=cost,
    )(x_in, w1, b1, w2p, b2p)

    return out[:N, :out_dim]


def init_linear_params(key, in_features, out_features, dtype=jnp.float32):
    """Deterministic init mimicking PyTorch nn.Linear default (uniform +/-1/sqrt(in))."""
    kw, kb = jax.random.split(key)
    bound = 1.0 / (in_features ** 0.5)
    # Stored transposed relative to PyTorch: (in, out)
    w = jax.random.uniform(kw, (in_features, out_features), dtype, -bound, bound)
    b = jax.random.uniform(kb, (1, out_features), dtype, -bound, bound)
    return w, b


if __name__ == "__main__":
    # Small shapes consistent with the module: batch=64, input=32, hidden=64, output=16
    N, INPUT, HIDDEN, OUTPUT = 64, 32, 64, 16

    key = jax.random.PRNGKey(0)
    kx, k1, k2 = jax.random.split(key, 3)

    x = jax.random.normal(kx, (N, INPUT), jnp.float32)
    w1, b1 = init_linear_params(k1, INPUT, HIDDEN)
    w2, b2 = init_linear_params(k2, HIDDEN, OUTPUT)

    out = attribute_network(x, w1, b1, w2, b2)
    out = jax.block_until_ready(out)

    # Reference check in plain JAX
    ref = jnp.maximum(jnp.maximum(x @ w1 + b1, 0.0) @ w2 + b2, 0.0)
    assert out.shape == (N, OUTPUT)
    assert jnp.allclose(out, ref, atol=1e-5, rtol=1e-5), "mismatch vs reference"

    # Ragged-batch path (cdiv grid + padding, multi-step grid) quick check.
    xr = x[:50]
    outr = jax.block_until_ready(attribute_network(xr, w1, b1, w2, b2))
    refr = jnp.maximum(jnp.maximum(xr @ w1 + b1, 0.0) @ w2 + b2, 0.0)
    assert outr.shape == (50, OUTPUT)
    assert jnp.allclose(outr, refr, atol=1e-5, rtol=1e-5), "ragged mismatch"

    print("KERNEL_OK")
</pallas_src>

<mosaic_0001>
module attributes {stable_mosaic.version = 11 : i64} {
  func.func @attribute_network_kernel(%arg0: i32, %arg1: memref<64x32xf32, #tpu.memory_space<vmem>>, %arg2: memref<32x64xf32, #tpu.memory_space<vmem>>, %arg3: memref<1x64xf32, #tpu.memory_space<vmem>>, %arg4: memref<64x128xf32, #tpu.memory_space<vmem>>, %arg5: memref<1x128xf32, #tpu.memory_space<vmem>>, %arg6: memref<64x128xf32, #tpu.memory_space<vmem>>) attributes {dimension_semantics = [#tpu.dimension_semantics<parallel>], iteration_bounds = array<i64: 1>, scalar_prefetch = 0 : i64, scratch_operands = 0 : i64, tpu.core_type = #tpu.core_type<tc>, window_params = [{transform_indices = @transform_0, window_bounds = array<i64: 64, 32>}, {pipeline_mode = #tpu.pipeline_mode<synchronous>, transform_indices = @transform_1, window_bounds = array<i64: 32, 64>}, {pipeline_mode = #tpu.pipeline_mode<synchronous>, transform_indices = @transform_2, window_bounds = array<i64: 1, 64>}, {pipeline_mode = #tpu.pipeline_mode<synchronous>, transform_indices = @transform_3, window_bounds = array<i64: 64, 128>}, {pipeline_mode = #tpu.pipeline_mode<synchronous>, transform_indices = @transform_4, window_bounds = array<i64: 1, 128>}, {transform_indices = @transform_5, window_bounds = array<i64: 64, 128>}]} {
    %c0 = arith.constant 0 : index
    %c0_0 = arith.constant 0 : index
    %0 = vector.load %arg1[%c0, %c0_0] : memref<64x32xf32, #tpu.memory_space<vmem>>, vector<64x32xf32>
    %c0_1 = arith.constant 0 : index
    %c0_2 = arith.constant 0 : index
    %1 = vector.load %arg2[%c0_1, %c0_2] : memref<32x64xf32, #tpu.memory_space<vmem>>, vector<32x64xf32>
    %cst = arith.constant dense<0.000000e+00> : vector<64x64xf32>
    %2 = tpu.matmul %0, %1, %cst {dimension_numbers = #tpu.dot_dimension_numbers<[1], [0], [0], [1], [0, 0, 1, 1], [], []>} : vector<64x32xf32>, vector<32x64xf32>, vector<64x64xf32> -> vector<64x64xf32>
    %c0_3 = arith.constant 0 : index
    %c0_4 = arith.constant 0 : index
    %3 = vector.load %arg3[%c0_3, %c0_4] : memref<1x64xf32, #tpu.memory_space<vmem>>, vector<1x64xf32>
    %4 = vector.broadcast %3 : vector<1x64xf32> to vector<64x64xf32>
    %5 = arith.addf %2, %4 : vector<64x64xf32>
    %cst_5 = arith.constant 0.000000e+00 : f32
    %6 = vector.broadcast %cst_5 : f32 to vector<64x64xf32>
    %7 = arith.maximumf %5, %6 : vector<64x64xf32>
    %c0_6 = arith.constant 0 : index
    %c0_7 = arith.constant 0 : index
    %8 = vector.load %arg4[%c0_6, %c0_7] : memref<64x128xf32, #tpu.memory_space<vmem>>, vector<64x128xf32>
    %cst_8 = arith.constant dense<0.000000e+00> : vector<64x128xf32>
    %9 = tpu.matmul %7, %8, %cst_8 {dimension_numbers = #tpu.dot_dimension_numbers<[1], [0], [0], [1], [0, 0, 1, 1], [], []>} : vector<64x64xf32>, vector<64x128xf32>, vector<64x128xf32> -> vector<64x128xf32>
    %c0_9 = arith.constant 0 : index
    %c0_10 = arith.constant 0 : index
    %10 = vector.load %arg5[%c0_9, %c0_10] : memref<1x128xf32, #tpu.memory_space<vmem>>, vector<1x128xf32>
    %11 = vector.broadcast %10 : vector<1x128xf32> to vector<64x128xf32>
    %12 = arith.addf %9, %11 : vector<64x128xf32>
    %cst_11 = arith.constant 0.000000e+00 : f32
    %13 = vector.broadcast %cst_11 : f32 to vector<64x128xf32>
    %14 = arith.maximumf %12, %13 : vector<64x128xf32>
    %c0_12 = arith.constant 0 : index
    %c0_13 = arith.constant 0 : index
    %15 = vector.load %arg6[%c0_12, %c0_13] : memref<64x128xf32, #tpu.memory_space<vmem>>, vector<64x128xf32>
    tpu.vector_store %arg6[%c0_12, %c0_13], %14 {strides = array<i32>} : memref<64x128xf32, #tpu.memory_space<vmem>>, vector<64x128xf32>,
    return
  }
  func.func @transform_0(%arg0: i32) -> (i32, i32) {
    %c0_i32 = arith.constant 0 : i32
    %c0_i32_0 = arith.constant 0 : i32
    return %arg0, %c0_i32 : i32, i32
  }
  func.func @transform_1(%arg0: i32) -> (i32, i32) {
    %c0_i32 = arith.constant 0 : i32
    %c0_i32_0 = arith.constant 0 : i32
    %c0_i32_1 = arith.constant 0 : i32
    return %c0_i32, %c0_i32_0 : i32, i32
  }
  func.func @transform_2(%arg0: i32) -> (i32, i32) {
    %c0_i32 = arith.constant 0 : i32
    %c0_i32_0 = arith.constant 0 : i32
    %c0_i32_1 = arith.constant 0 : i32
    return %c0_i32, %c0_i32_0 : i32, i32
  }
  func.func @transform_3(%arg0: i32) -> (i32, i32) {
    %c0_i32 = arith.constant 0 : i32
    %c0_i32_0 = arith.constant 0 : i32
    %c0_i32_1 = arith.constant 0 : i32
    return %c0_i32, %c0_i32_0 : i32, i32
  }
  func.func @transform_4(%arg0: i32) -> (i32, i32) {
    %c0_i32 = arith.constant 0 : i32
    %c0_i32_0 = arith.constant 0 : i32
    %c0_i32_1 = arith.constant 0 : i32
    return %c0_i32, %c0_i32_0 : i32, i32
  }
  func.func @transform_5(%arg0: i32) -> (i32, i32) {
    %c0_i32 = arith.constant 0 : i32
    %c0_i32_0 = arith.constant 0 : i32
    return %arg0, %c0_i32 : i32, i32
  }
}

</mosaic_0001>

<llo_original>
// kernel: tpu_custom_call.1
$region0: #{tpu_custom_call.1}
  #allocation0 [shape = 'u32[]', space=smem, size = 0x4, offset = 0x4, fixed_abs, tag = 'smem constant byte address 0x4 - core index']
  #allocation1 [shape = 'u32[144,128]{1,0:T(1,128)}', space=vmem, size = 0x12000, scoped, tag = 'internal scratch']
  %s0 = inlined_call_operand.vmem [shape: f32[64,32], index: 0, kind: input, shape index: {}]
  %s1 = inlined_call_operand.vmem [shape: f32[32,64], index: 1, kind: input, shape index: {}]
  %s2 = inlined_call_operand.vmem [shape: f32[1,64], index: 2, kind: input, shape index: {}]
  %s3 = inlined_call_operand.vmem [shape: f32[64,128], index: 3, kind: input, shape index: {}]
  %s4 = inlined_call_operand.vmem [shape: f32[1,128], index: 4, kind: input, shape index: {}]
  %s5 = inlined_call_operand.hbm [shape: f32[64,128], index: 5, kind: output, shape index: {}]
  %s6 = sld [smem:[#allocation0]]
  $region30: #{tpu_custom_call.1} parent=0
    _
  %s8 = ssub.s32 1, %s6
  %s9 = scalar_select 0, %s8, %s6
  $region1: #{tpu_custom_call.1} parent=0
    #allocation2 [shape = 'u8[32768]{0}', space=vmem, size = 0x8000, scoped, tag = 'output window, operand 0, single buffered']
    #allocation3 [shape = 's32[1]{0}', space=sflag, size = 0x4, scoped, tag = 'scoped memory for tpu_custom_call.1']
    %10 = vsyncpa [#allocation3], 0
    // Predicated region
    $region2: #{tpu_custom_call.1} parent=1 // pred_check
      _
    $region3: #{tpu_custom_call.1} parent=1 // pred_check_branch
      %12 = sbr.rel (0) target = $region5
    $region4: #{tpu_custom_call.1} parent=1 // pred_region
      _
    $region5: #{tpu_custom_call.1} parent=1 // pred_fallthru
      _
    // Predicated region
    $region6: #{tpu_custom_call.1} parent=1 // pred_check
      _
    $region7: #{tpu_custom_call.1} parent=1 // pred_check_branch
      %14 = sbr.rel (0) target = $region9
    $region8: #{tpu_custom_call.1} parent=1 // pred_region
      _
    $region9: #{tpu_custom_call.1} parent=1 // pred_fallthru
      _
    // Predicated region
    $region10: #{tpu_custom_call.1} parent=1 // pred_check
      _
    $region11: #{tpu_custom_call.1} parent=1 // pred_check_branch
      %16 = sbr.rel (0) target = $region13
    $region12: #{tpu_custom_call.1} parent=1 // pred_region
      _
    $region13: #{tpu_custom_call.1} parent=1 // pred_fallthru
      _
    // Predicated region
    $region14: #{tpu_custom_call.1} parent=1 // pred_check
      _
    $region15: #{tpu_custom_call.1} parent=1 // pred_check_branch
      %18 = sbr.rel (0) target = $region17
    $region16: #{tpu_custom_call.1} parent=1 // pred_region
      _
    $region17: #{tpu_custom_call.1} parent=1 // pred_fallthru
      _
    // Predicated region
    $region18: #{tpu_custom_call.1} parent=1 // pred_check
      _
    $region19: #{tpu_custom_call.1} parent=1 // pred_check_branch
      %20 = sbr.rel (0) target = $region21
    $region20: #{tpu_custom_call.1} parent=1 // pred_region
      _
    $region21: #{tpu_custom_call.1} parent=1 // pred_fallthru
      _
    %v21 = vld [vmem:[%s0] sm:$0xff]
    %v22 = vld [vmem:[%s0 + $0x8] sm:$0xff]
    %v23 = vld [vmem:[%s0 + $0x10] sm:$0xff]
    %v24 = vld [vmem:[%s0 + $0x18] sm:$0xff]
    %v25 = vld [vmem:[%s0 + $0x20] sm:$0xff]
    %v26 = vld [vmem:[%s0 + $0x28] sm:$0xff]
    %v27 = vld [vmem:[%s0 + $0x30] sm:$0xff]
    %v28 = vld [vmem:[%s0 + $0x38] sm:$0xff]
    %v29 = vld [vmem:[%s1] sm:$0xff]
    %v30 = vld [vmem:[%s1 + $0x8] sm:$0xff]
    %v31 = vld [vmem:[%s1 + $0x10] sm:$0xff]
    %v32 = vld [vmem:[%s1 + $0x18] sm:$0xff]
    %v33 = vld [vmem:[%s2] sm:$0x1]
    %v35 = vlaneseq
    %v36 = vshrl.u32 %v35, 7
    %v37 = vsub.s32 0, %v36
    %v38 = vrot.slane %v33, %v37
    %vm40 = vcmask 261120
    %v42 = vsel %vm40, %v21, 0
    %v45 = vsel %vm40, %v22, 0
    %v48 = vsel %vm40, %v23, 0
    %v51 = vsel %vm40, %v24, 0
    %v54 = vsel %vm40, %v25, 0
    %v57 = vsel %vm40, %v26, 0
    %v60 = vsel %vm40, %v27, 0
    %v63 = vsel %vm40, %v28, 0
    %65 = vmatprep.subr.mxu0 0.0
    %66 = vmatpush1.msra.mxu0 0.0
    %67 = vmatprep.subr.mxu0 0.0
    %68 = vmatpush1.msra.mxu0 0.0
    %69 = vmatprep.subr.mxu0 0.0
    %70 = vmatpush1.msra.mxu0 0.0
    %71 = vmatprep.subr.mxu0 0.0
    %72 = vmatpush1.msra.mxu0 0.0
    %73 = vmatprep.subr.mxu0 0.0
    %74 = vmatpush1.msra.mxu0 0.0
    %75 = vmatprep.subr.mxu0 0.0
    %76 = vmatpush1.msra.mxu0 0.0
    %77 = vmatprep.subr.mxu0 0.0
    %78 = vmatpush1.msra.mxu0 0.0
    %79 = vmatprep.subr.mxu0 0.0
    %80 = vmatpush1.msra.mxu0 0.0
    %81 = vmatprep.subr.mxu0 0.0
    %82 = vmatpush1.msra.mxu0 0.0
    %83 = vmatprep.subr.mxu0 0.0
    %84 = vmatpush1.msra.mxu0 0.0
    %85 = vmatprep.subr.mxu0 0.0
    %86 = vmatpush1.msra.mxu0 0.0
    %87 = vmatprep.subr.mxu0 0.0
    %88 = vmatpush1.msra.mxu0 0.0
    %89 = vmatprep.subr.mxu0 0.0
    %90 = vmatpush1.msra.mxu0 %v32
    %91 = vmatprep.subr.mxu0 0.0
    %92 = vmatpush1.msra.mxu0 %v31
    %93 = vmatprep.subr.mxu0 0.0
    %94 = vmatpush1.msra.mxu0 %v30
    %95 = vmatprep.subr.mxu0 0.0
    %96 = vmatpush1.msra.mxu0 %v29
    %97 = vmatprep.subr.mxu0 0.0
    %98 = vmatpush2.msra.mxu0 0.0
    %99 = vmatprep.subr.mxu0 0.0
    %100 = vmatpush2.msra.mxu0 0.0
    %101 = vmatprep.subr.mxu0 0.0
    %102 = vmatpush2.msra.mxu0 0.0
    %103 = vmatprep.subr.mxu0 0.0
    %104 = vmatpush2.msra.mxu0 0.0
    %105 = vmatprep.subr.mxu0 0.0
    %106 = vmatpush2.msra.mxu0 0.0
    %107 = vmatprep.subr.mxu0 0.0
    %108 = vmatpush2.msra.mxu0 0.0
    %109 = vmatprep.subr.mxu0 0.0
    %110 = vmatpush2.msra.mxu0 0.0
    %111 = vmatprep.subr.mxu0 0.0
    %112 = vmatpush2.msra.mxu0 0.0
    %113 = vmatprep.subr.mxu0 0.0
    %114 = vmatpush2.msra.mxu0 0.0
    %115 = vmatprep.subr.mxu0 0.0
    %116 = vmatpush2.msra.mxu0 0.0
    %117 = vmatprep.subr.mxu0 0.0
    %118 = vmatpush2.msra.mxu0 0.0
    %119 = vmatprep.subr.mxu0 0.0
    %120 = vmatpush2.msra.mxu0 0.0
    %121 = vmatprep.subr.mxu0 0.0
    %122 = vmatpush2.msra.mxu0 0.0
    %123 = vmatprep.subr.mxu0 0.0
    %124 = vmatpush2.msra.mxu0 0.0
    %125 = vmatprep.subr.mxu0 0.0
    %126 = vmatpush2.msra.mxu0 0.0
    %127 = vmatprep.subr.mxu0 0.0
    %128 = vmatpush2.msra.mxu0 0.0
    %129 = vmatprep.mubr.f32.mxu0 0.0
    %130 = vmatmul.mubr.f32.gmra.mxu0 %v42
    %v131 = vpop.f32.mrf.mxu0
    %v132 = vadd.f32 %v38, %v131
    %v133 = vpop.f32.mrf.mxu0
    %134 = vmatprep.mubr.f32.mxu0 0.0
    %135 = vmatmul.mubr.f32.gmra.mxu0 %v45
    %v136 = vpop.f32.mrf.mxu0
    %v137 = vadd.f32 %v38, %v136
    %v138 = vpop.f32.mrf.mxu0
    %139 = vmatprep.mubr.f32.mxu0 0.0
    %140 = vmatmul.mubr.f32.gmra.mxu0 %v48
    %v141 = vpop.f32.mrf.mxu0
    %v142 = vadd.f32 %v38, %v141
    %v143 = vpop.f32.mrf.mxu0
    %144 = vmatprep.mubr.f32.mxu0 0.0
    %145 = vmatmul.mubr.f32.gmra.mxu0 %v51
    %v146 = vpop.f32.mrf.mxu0
    %v147 = vadd.f32 %v38, %v146
    %v148 = vpop.f32.mrf.mxu0
    %149 = vmatprep.mubr.f32.mxu0 0.0
    %150 = vmatmul.mubr.f32.gmra.mxu0 %v54
    %v151 = vpop.f32.mrf.mxu0
    %v152 = vadd.f32 %v38, %v151
    %v153 = vpop.f32.mrf.mxu0
    %154 = vmatprep.mubr.f32.mxu0 0.0
    %155 = vmatmul.mubr.f32.gmra.mxu0 %v57
    %v156 = vpop.f32.mrf.mxu0
    %v157 = vadd.f32 %v38, %v156
    %v158 = vpop.f32.mrf.mxu0
    %159 = vmatprep.mubr.f32.mxu0 0.0
    %160 = vmatmul.mubr.f32.gmra.mxu0 %v60
    %v161 = vpop.f32.mrf.mxu0
    %v162 = vadd.f32 %v38, %v161
    %v163 = vpop.f32.mrf.mxu0
    %164 = vmatprep.mubr.f32.mxu0 0.0
    %165 = vmatmul.mubr.f32.gmra.mxu0 %v63
    %v166 = vpop.f32.mrf.mxu0
    %v167 = vadd.f32 %v38, %v166
    %v168 = vpop.f32.mrf.mxu0
    %169 = vdwg.mxu0
    %v170 = vmax.f32 %v132, 0.0
    %v171 = vmax.f32 %v137, 0.0
    %v172 = vmax.f32 %v142, 0.0
    %v173 = vmax.f32 %v147, 0.0
    %v174 = vmax.f32 %v152, 0.0
    %v175 = vmax.f32 %v157, 0.0
    %v176 = vmax.f32 %v162, 0.0
    %v177 = vmax.f32 %v167, 0.0
    %v178 = vld [vmem:[%s3] sm:$0xff]
    %v179 = vld [vmem:[%s3 + $0x8] sm:$0xff]
    %v180 = vld [vmem:[%s3 + $0x10] sm:$0xff]
    %v181 = vld [vmem:[%s3 + $0x18] sm:$0xff]
    %v182 = vld [vmem:[%s3 + $0x20] sm:$0xff]
    %v183 = vld [vmem:[%s3 + $0x28] sm:$0xff]
    %v184 = vld [vmem:[%s3 + $0x30] sm:$0xff]
    %v185 = vld [vmem:[%s3 + $0x38] sm:$0xff]
    %v186 = vld [vmem:[%s4] sm:$0x1]
    %v188 = vlaneseq
    %v189 = vshrl.u32 %v188, 7
    %v190 = vsub.s32 0, %v189
    %v191 = vrot.slane %v186, %v190
    %vm193 = vcmask 523264
    %v195 = vsel %vm193, %v170, 0
    %v198 = vsel %vm193, %v171, 0
    %v201 = vsel %vm193, %v172, 0
    %v204 = vsel %vm193, %v173, 0
    %v207 = vsel %vm193, %v174, 0
    %v210 = vsel %vm193, %v175, 0
    %v213 = vsel %vm193, %v176, 0
    %v216 = vsel %vm193, %v177, 0
    %218 = vmatprep.subr.mxu0 0.0
    %219 = vmatpush1.msra.mxu0 0.0
    %220 = vmatprep.subr.mxu0 0.0
    %221 = vmatpush1.msra.mxu0 0.0
    %222 = vmatprep.subr.mxu0 0.0
    %223 = vmatpush1.msra.mxu0 0.0
    %224 = vmatprep.subr.mxu0 0.0
    %225 = vmatpush1.msra.mxu0 0.0
    %226 = vmatprep.subr.mxu0 0.0
    %227 = vmatpush1.msra.mxu0 0.0
    %228 = vmatprep.subr.mxu0 0.0
    %229 = vmatpush1.msra.mxu0 0.0
    %230 = vmatprep.subr.mxu0 0.0
    %231 = vmatpush1.msra.mxu0 0.0
    %232 = vmatprep.subr.mxu0 0.0
    %233 = vmatpush1.msra.mxu0 0.0
    %234 = vmatprep.subr.mxu0 0.0
    %235 = vmatpush1.msra.mxu0 %v185
    %236 = vmatprep.subr.mxu0 0.0
    %237 = vmatpush1.msra.mxu0 %v184
    %238 = vmatprep.subr.mxu0 0.0
    %239 = vmatpush1.msra.mxu0 %v183
    %240 = vmatprep.subr.mxu0 0.0
    %241 = vmatpush1.msra.mxu0 %v182
    %242 = vmatprep.subr.mxu0 0.0
    %243 = vmatpush1.msra.mxu0 %v181
    %244 = vmatprep.subr.mxu0 0.0
    %245 = vmatpush1.msra.mxu0 %v180
    %246 = vmatprep.subr.mxu0 0.0
    %247 = vmatpush1.msra.mxu0 %v179
    %248 = vmatprep.subr.mxu0 0.0
    %249 = vmatpush1.msra.mxu0 %v178
    %250 = vmatprep.subr.mxu0 0.0
    %251 = vmatpush2.msra.mxu0 0.0
    %252 = vmatprep.subr.mxu0 0.0
    %253 = vmatpush2.msra.mxu0 0.0
    %254 = vmatprep.subr.mxu0 0.0
    %255 = vmatpush2.msra.mxu0 0.0
    %256 = vmatprep.subr.mxu0 0.0
    %257 = vmatpush2.msra.mxu0 0.0
    %258 = vmatprep.subr.mxu0 0.0
    %259 = vmatpush2.msra.mxu0 0.0
    %260 = vmatprep.subr.mxu0 0.0
    %261 = vmatpush2.msra.mxu0 0.0
    %262 = vmatprep.subr.mxu0 0.0
    %263 = vmatpush2.msra.mxu0 0.0
    %264 = vmatprep.subr.mxu0 0.0
    %265 = vmatpush2.msra.mxu0 0.0
    %266 = vmatprep.subr.mxu0 0.0
    %267 = vmatpush2.msra.mxu0 0.0
    %268 = vmatprep.subr.mxu0 0.0
    %269 = vmatpush2.msra.mxu0 0.0
    %270 = vmatprep.subr.mxu0 0.0
    %271 = vmatpush2.msra.mxu0 0.0
    %272 = vmatprep.subr.mxu0 0.0
    %273 = vmatpush2.msra.mxu0 0.0
    %274 = vmatprep.subr.mxu0 0.0
    %275 = vmatpush2.msra.mxu0 0.0
    %276 = vmatprep.subr.mxu0 0.0
    %277 = vmatpush2.msra.mxu0 0.0
    %278 = vmatprep.subr.mxu0 0.0
    %279 = vmatpush2.msra.mxu0 0.0
    %280 = vmatprep.subr.mxu0 0.0
    %281 = vmatpush2.msra.mxu0 0.0
    %282 = vmatprep.mubr.f32.mxu0 0.0
    %283 = vmatmul.mubr.f32.gmra.mxu0 %v195
    %v284 = vpop.f32.mrf.mxu0
    %v285 = vadd.f32 %v191, %v284
    %v286 = vpop.f32.mrf.mxu0
    %287 = vmatprep.mubr.f32.mxu0 0.0
    %288 = vmatmul.mubr.f32.gmra.mxu0 %v198
    %v289 = vpop.f32.mrf.mxu0
    %v290 = vadd.f32 %v191, %v289
    %v291 = vpop.f32.mrf.mxu0
    %292 = vmatprep.mubr.f32.mxu0 0.0
    %293 = vmatmul.mubr.f32.gmra.mxu0 %v201
    %v294 = vpop.f32.mrf.mxu0
    %v295 = vadd.f32 %v191, %v294
    %v296 = vpop.f32.mrf.mxu0
    %297 = vmatprep.mubr.f32.mxu0 0.0
    %298 = vmatmul.mubr.f32.gmra.mxu0 %v204
    %v299 = vpop.f32.mrf.mxu0
    %v300 = vadd.f32 %v191, %v299
    %v301 = vpop.f32.mrf.mxu0
    %302 = vmatprep.mubr.f32.mxu0 0.0
    %303 = vmatmul.mubr.f32.gmra.mxu0 %v207
    %v304 = vpop.f32.mrf.mxu0
    %v305 = vadd.f32 %v191, %v304
    %v306 = vpop.f32.mrf.mxu0
    %307 = vmatprep.mubr.f32.mxu0 0.0
    %308 = vmatmul.mubr.f32.gmra.mxu0 %v210
    %v309 = vpop.f32.mrf.mxu0
    %v310 = vadd.f32 %v191, %v309
    %v311 = vpop.f32.mrf.mxu0
    %312 = vmatprep.mubr.f32.mxu0 0.0
    %313 = vmatmul.mubr.f32.gmra.mxu0 %v213
    %v314 = vpop.f32.mrf.mxu0
    %v315 = vadd.f32 %v191, %v314
    %v316 = vpop.f32.mrf.mxu0
    %317 = vmatprep.mubr.f32.mxu0 0.0
    %318 = vmatmul.mubr.f32.gmra.mxu0 %v216
    %v319 = vpop.f32.mrf.mxu0
    %v320 = vadd.f32 %v191, %v319
    %v321 = vpop.f32.mrf.mxu0
    %322 = vdwg.mxu0
    %v323 = vmax.f32 %v285, 0.0
    %v324 = vmax.f32 %v290, 0.0
    %v325 = vmax.f32 %v295, 0.0
    %v326 = vmax.f32 %v300, 0.0
    %v327 = vmax.f32 %v305, 0.0
    %v328 = vmax.f32 %v310, 0.0
    %v329 = vmax.f32 %v315, 0.0
    %v330 = vmax.f32 %v320, 0.0
    %331 = vst [vmem:[#allocation2] sm:$0xff] %v323
    %332 = vst [vmem:[#allocation2 + $0x8] sm:$0xff] %v324
    %333 = vst [vmem:[#allocation2 + $0x10] sm:$0xff] %v325
    %334 = vst [vmem:[#allocation2 + $0x18] sm:$0xff] %v326
    %335 = vst [vmem:[#allocation2 + $0x20] sm:$0xff] %v327
    %336 = vst [vmem:[#allocation2 + $0x28] sm:$0xff] %v328
    %337 = vst [vmem:[#allocation2 + $0x30] sm:$0xff] %v329
    %338 = vst [vmem:[#allocation2 + $0x38] sm:$0xff] %v330
    // Predicated region
    $region22: #{tpu_custom_call.1} parent=1 // pred_check
      _
    $region23: #{tpu_custom_call.1} parent=1 // pred_check_branch
      %340 = sbr.rel (0) target = $region25
    $region24: #{tpu_custom_call.1} parent=1 // pred_region
      %s342 = ssub.s32 1024, 1024
      %343 = vsyncadd [#allocation3], %s342
      %s344 = sshll.u32 [#allocation2], 4
      %s345 = int_to_ptr.vmem [resolvable:$true] %s344
      %350 = dma.vmem_to_hbm [thread:$0]  %s345, 1024, %s5, [#allocation3], 128, 128, 8
    $region25: #{tpu_custom_call.1} parent=1 // pred_fallthru
      _
    // Predicated region
    $region26: #{tpu_custom_call.1} parent=1 // pred_check
      _
    $region27: #{tpu_custom_call.1} parent=1 // pred_check_branch
      %352 = sbr.rel (0) target = $region29
    $region28: #{tpu_custom_call.1} parent=1 // pred_region
      %353 = dma.done [#allocation3], 1024
    $region29: #{tpu_custom_call.1} parent=1 // pred_fallthru
      _
    %354 = vsyncpa [#allocation3], 1

</llo_original>
